<compile_context>
chip_gen: v5e
topology: v5e:2x2
jax: 0.10.0
libtpu: 0.0.40
codegen_flags: <defaults>
</compile_context>

<pallas_src>
import jax
import jax.numpy as jnp
from jax.experimental import pallas as pl
from jax.experimental.pallas import tpu as pltpu

_LANES = 128
_VMEM_BUDGET_BYTES = 22 * 1024 * 1024   # tile-sizing budget (limit below is 32 MiB)
_VMEM_LIMIT_BYTES = 32 * 1024 * 1024


def _mlp_kernel(x_ref, w1_ref, w2_ref, w3_ref, b_ref, o_ref):
    # bf16 MXU inputs, f32 accumulation; bias add + ReLU in f32.
    x = x_ref[...].astype(jnp.bfloat16)
    h1 = jnp.dot(x, w1_ref[...], preferred_element_type=jnp.float32) + b_ref[0:1, :]
    h1 = jnp.maximum(h1, 0.0)
    h2 = jnp.dot(h1.astype(jnp.bfloat16), w2_ref[...],
                 preferred_element_type=jnp.float32) + b_ref[1:2, :]
    h2 = jnp.maximum(h2, 0.0)
    out = jnp.dot(h2.astype(jnp.bfloat16), w3_ref[...],
                  preferred_element_type=jnp.float32) + b_ref[2:3, :]
    # Narrow store: only the 2 real output lanes hit HBM (padding cols are exactly 0).
    o_ref[...] = out[:, :2].astype(o_ref.dtype)


def _round_up(n, m):
    return (n + m - 1) // m * m


def pack_params(params):
    """Call ONCE per parameter set (hoisted out of the per-call path).

    Zero-pads feature dims to 128 lanes, casts weights to bf16, packs the three
    biases into a single (3, 128) f32 slab. Padding columns are exactly zero, so
    the in-kernel [:, :2] slice is exact.
    """
    w1, b1 = params["w1"], params["b1"]   # (D, 64), (1, 64)
    w2, b2 = params["w2"], params["b2"]   # (64, 32), (1, 32)
    w3, b3 = params["w3"], params["b3"]   # (32, 2),  (1, 2)
    D = w1.shape[0]

    w1p = jnp.zeros((D, _LANES), jnp.float32).at[:, :64].set(w1).astype(jnp.bfloat16)
    w2p = jnp.zeros((_LANES, _LANES), jnp.float32).at[:64, :32].set(w2).astype(jnp.bfloat16)
    w3p = jnp.zeros((_LANES, _LANES), jnp.float32).at[:32, :2].set(w3).astype(jnp.bfloat16)

    bp = jnp.zeros((3, _LANES), jnp.float32)
    bp = bp.at[0, :64].set(b1[0])
    bp = bp.at[1, :32].set(b2[0])
    bp = bp.at[2, :2].set(b3[0])
    return w1p, w2p, w3p, bp


def _choose_tile(B, D, tile_b):
    """Pick the batch tile: big (step-overhead bound), >=2 grid steps when possible
    (v7x megacore), multiple of 8 rows, clamped to a conservative VMEM budget."""
    if B <= 8:
        return B                                   # single block; equals the full dim
    n_steps = max(pl.cdiv(B, tile_b), 2)           # >=2 steps so both v7x TCs get work
    tb = _round_up(pl.cdiv(B, n_steps), 8)

    # VMEM clamp: double-buffered f32 x (lane-padded) + narrow out, plus f32/bf16
    # intermediates scratch, plus the resident (double-buffered) weights/bias.
    d_pad = _round_up(D, _LANES)
    bytes_per_row = (2 * d_pad + 8 * _LANES) * 4
    weight_bytes = 2 * (d_pad * _LANES * 2 + 2 * _LANES * _LANES * 2 + 8 * _LANES * 4)
    max_tb = max(8, ((_VMEM_BUDGET_BYTES - weight_bytes) // bytes_per_row) // 8 * 8)
    return max(8, min(tb, max_tb))


def emission_predictor_forward(x, packed_params, tile_b=2048):
    """x: (B, input_dim) float32 (or bfloat16) -> (B, 2) float32.

    `packed_params` is the tuple returned by `pack_params` (pack once, reuse).
    Matches the PyTorch EmissionPredictor forward (bf16 MXU inputs, f32 accumulation).
    """
    w1p, w2p, w3p, bp = packed_params
    B, D = x.shape
    assert w1p.shape[0] == D, "input_dim mismatch between x and packed params"

    TB = _choose_tile(B, D, tile_b)
    grid = pl.cdiv(B, TB)                          # ragged last block handled by Pallas

    out = pl.pallas_call(
        _mlp_kernel,
        out_shape=jax.ShapeDtypeStruct((B, 2), jnp.float32),
        grid=(grid,),
        in_specs=[
            pl.BlockSpec((TB, D), lambda i: (i, 0)),           # x: streamed per tile
            pl.BlockSpec((D, _LANES), lambda i: (0, 0)),       # w1: VMEM-resident
            pl.BlockSpec((_LANES, _LANES), lambda i: (0, 0)),  # w2: resident
            pl.BlockSpec((_LANES, _LANES), lambda i: (0, 0)),  # w3: resident (padded)
            pl.BlockSpec((3, _LANES), lambda i: (0, 0)),       # packed biases: resident
        ],
        out_specs=pl.BlockSpec((TB, 2), lambda i: (i, 0)),     # narrow (2-lane) output
        compiler_params=pltpu.CompilerParams(
            dimension_semantics=("parallel",),
            vmem_limit_bytes=_VMEM_LIMIT_BYTES,    # raises v5e's 16 MiB scoped default
        ),
    )(x, w1p, w2p, w3p, bp)
    return out


def init_params(key, input_dim):
    """Deterministic init mirroring the nn.Linear shapes of EmissionPredictor."""
    k1, k2, k3, k4, k5, k6 = jax.random.split(key, 6)

    def lin(kw, kb, fan_in, fan_out):
        # PyTorch default: U(-1/sqrt(fan_in), 1/sqrt(fan_in)); stored transposed (in, out).
        bound = 1.0 / jnp.sqrt(jnp.float32(fan_in))
        w = jax.random.uniform(kw, (fan_in, fan_out), jnp.float32, -bound, bound)
        b = jax.random.uniform(kb, (1, fan_out), jnp.float32, -bound, bound)
        return w, b

    w1, b1 = lin(k1, k2, input_dim, 64)
    w2, b2 = lin(k3, k4, 64, 32)
    w3, b3 = lin(k5, k6, 32, 2)
    return {"w1": w1, "b1": b1, "w2": w2, "b2": b2, "w3": w3, "b3": b3}


def _reference_f32(x, p):
    h1 = jnp.maximum(x @ p["w1"] + p["b1"], 0.0)
    h2 = jnp.maximum(h1 @ p["w2"] + p["b2"], 0.0)
    return h2 @ p["w3"] + p["b3"]


def _reference_bf16(x, packed):
    # Same bf16-input / f32-accumulate math the kernel performs (on padded weights).
    w1p, w2p, w3p, bp = packed
    h1 = jnp.maximum(jnp.dot(x.astype(jnp.bfloat16), w1p,
                             preferred_element_type=jnp.float32) + bp[0:1], 0.0)
    h2 = jnp.maximum(jnp.dot(h1.astype(jnp.bfloat16), w2p,
                             preferred_element_type=jnp.float32) + bp[1:2], 0.0)
    out = jnp.dot(h2.astype(jnp.bfloat16), w3p,
                  preferred_element_type=jnp.float32) + bp[2:3]
    return out[:, :2]


if __name__ == "__main__":
    key = jax.random.PRNGKey(0)
    k_x, k_p, k_x2 = jax.random.split(key, 3)

    batch, input_dim = 8, 16
    x = jax.random.normal(k_x, (batch, input_dim), jnp.float32)
    params = init_params(k_p, input_dim)
    packed = pack_params(params)            # packed once, reused across calls

    out = jax.block_until_ready(emission_predictor_forward(x, packed))
    assert out.shape == (batch, 2)
    # Tight check against a reference doing the same bf16-input / f32-accum math.
    assert jnp.allclose(out, _reference_bf16(x, packed), atol=1e-3, rtol=1e-3)
    # Loose check against the full-f32 PyTorch-equivalent reference (bf16 MXU inputs).
    assert jnp.allclose(out, _reference_f32(x, params), atol=5e-2, rtol=5e-2)

    # Larger, non-tile-multiple batch to exercise the multi-step grid + ragged last block.
    batch2 = 1000
    x2 = jax.random.normal(k_x2, (batch2, input_dim), jnp.float32)
    out2 = jax.block_until_ready(emission_predictor_forward(x2, packed))
    assert out2.shape == (batch2, 2)
    assert jnp.allclose(out2, _reference_bf16(x2, packed), atol=1e-3, rtol=1e-3)
    assert jnp.allclose(out2, _reference_f32(x2, params), atol=5e-2, rtol=5e-2)

    print("KERNEL_OK")
</pallas_src>

<mosaic_0001>
module attributes {stable_mosaic.version = 11 : i64} {
  func.func @_mlp_kernel(%arg0: i32, %arg1: memref<8x16xf32, #tpu.memory_space<vmem>>, %arg2: memref<16x128xbf16, #tpu.memory_space<vmem>>, %arg3: memref<128x128xbf16, #tpu.memory_space<vmem>>, %arg4: memref<128x128xbf16, #tpu.memory_space<vmem>>, %arg5: memref<3x128xf32, #tpu.memory_space<vmem>>, %arg6: memref<8x2xf32, #tpu.memory_space<vmem>>) attributes {dimension_semantics = [#tpu.dimension_semantics<parallel>], iteration_bounds = array<i64: 1>, scalar_prefetch = 0 : i64, scratch_operands = 0 : i64, tpu.core_type = #tpu.core_type<tc>, window_params = [{transform_indices = @transform_0, window_bounds = array<i64: 8, 16>}, {pipeline_mode = #tpu.pipeline_mode<synchronous>, transform_indices = @transform_1, window_bounds = array<i64: 16, 128>}, {pipeline_mode = #tpu.pipeline_mode<synchronous>, transform_indices = @transform_2, window_bounds = array<i64: 128, 128>}, {pipeline_mode = #tpu.pipeline_mode<synchronous>, transform_indices = @transform_3, window_bounds = array<i64: 128, 128>}, {pipeline_mode = #tpu.pipeline_mode<synchronous>, transform_indices = @transform_4, window_bounds = array<i64: 3, 128>}, {transform_indices = @transform_5, window_bounds = array<i64: 8, 2>}]} {
    %c0 = arith.constant 0 : index
    %c0_0 = arith.constant 0 : index
    %0 = vector.load %arg1[%c0, %c0_0] : memref<8x16xf32, #tpu.memory_space<vmem>>, vector<8x16xf32>
    %1 = arith.truncf %0 : vector<8x16xf32> to vector<8x16xbf16>
    %c0_1 = arith.constant 0 : index
    %c0_2 = arith.constant 0 : index
    %2 = vector.load %arg2[%c0_1, %c0_2] : memref<16x128xbf16, #tpu.memory_space<vmem>>, vector<16x128xbf16>
    %cst = arith.constant dense<0.000000e+00> : vector<8x128xf32>
    %3 = tpu.matmul %1, %2, %cst {dimension_numbers = #tpu.dot_dimension_numbers<[1], [0], [0], [1], [0, 0, 1, 1], [], []>} : vector<8x16xbf16>, vector<16x128xbf16>, vector<8x128xf32> -> vector<8x128xf32>
    %c0_3 = arith.constant 0 : index
    %c0_4 = arith.constant 0 : index
    %4 = vector.load %arg5[%c0_3, %c0_4] : memref<3x128xf32, #tpu.memory_space<vmem>>, vector<1x128xf32>
    %5 = vector.broadcast %4 : vector<1x128xf32> to vector<8x128xf32>
    %6 = arith.addf %3, %5 : vector<8x128xf32>
    %cst_5 = arith.constant 0.000000e+00 : f32
    %7 = vector.broadcast %cst_5 : f32 to vector<8x128xf32>
    %8 = arith.maximumf %6, %7 : vector<8x128xf32>
    %9 = arith.truncf %8 : vector<8x128xf32> to vector<8x128xbf16>
    %c0_6 = arith.constant 0 : index
    %c0_7 = arith.constant 0 : index
    %10 = vector.load %arg3[%c0_6, %c0_7] : memref<128x128xbf16, #tpu.memory_space<vmem>>, vector<128x128xbf16>
    %cst_8 = arith.constant dense<0.000000e+00> : vector<8x128xf32>
    %11 = tpu.matmul %9, %10, %cst_8 {dimension_numbers = #tpu.dot_dimension_numbers<[1], [0], [0], [1], [0, 0, 1, 1], [], []>} : vector<8x128xbf16>, vector<128x128xbf16>, vector<8x128xf32> -> vector<8x128xf32>
    %c1 = arith.constant 1 : index
    %c0_9 = arith.constant 0 : index
    %12 = vector.load %arg5[%c1, %c0_9] : memref<3x128xf32, #tpu.memory_space<vmem>>, vector<1x128xf32>
    %13 = vector.broadcast %12 : vector<1x128xf32> to vector<8x128xf32>
    %14 = arith.addf %11, %13 : vector<8x128xf32>
    %cst_10 = arith.constant 0.000000e+00 : f32
    %15 = vector.broadcast %cst_10 : f32 to vector<8x128xf32>
    %16 = arith.maximumf %14, %15 : vector<8x128xf32>
    %17 = arith.truncf %16 : vector<8x128xf32> to vector<8x128xbf16>
    %c0_11 = arith.constant 0 : index
    %c0_12 = arith.constant 0 : index
    %18 = vector.load %arg4[%c0_11, %c0_12] : memref<128x128xbf16, #tpu.memory_space<vmem>>, vector<128x128xbf16>
    %cst_13 = arith.constant dense<0.000000e+00> : vector<8x128xf32>
    %19 = tpu.matmul %17, %18, %cst_13 {dimension_numbers = #tpu.dot_dimension_numbers<[1], [0], [0], [1], [0, 0, 1, 1], [], []>} : vector<8x128xbf16>, vector<128x128xbf16>, vector<8x128xf32> -> vector<8x128xf32>
    %c2 = arith.constant 2 : index
    %c0_14 = arith.constant 0 : index
    %20 = vector.load %arg5[%c2, %c0_14] : memref<3x128xf32, #tpu.memory_space<vmem>>, vector<1x128xf32>
    %21 = vector.broadcast %20 : vector<1x128xf32> to vector<8x128xf32>
    %22 = arith.addf %19, %21 : vector<8x128xf32>
    %23 = vector.extract_strided_slice %22 {offsets = [0, 0], sizes = [8, 2], strides = [1, 1]} : vector<8x128xf32> to vector<8x2xf32>
    %c0_15 = arith.constant 0 : index
    %c0_16 = arith.constant 0 : index
    %24 = vector.load %arg6[%c0_15, %c0_16] : memref<8x2xf32, #tpu.memory_space<vmem>>, vector<8x2xf32>
    tpu.vector_store %arg6[%c0_15, %c0_16], %23 {strides = array<i32>} : memref<8x2xf32, #tpu.memory_space<vmem>>, vector<8x2xf32>,
    return
  }
  func.func @transform_0(%arg0: i32) -> (i32, i32) {
    %c0_i32 = arith.constant 0 : i32
    %c0_i32_0 = arith.constant 0 : i32
    return %arg0, %c0_i32 : i32, i32
  }
  func.func @transform_1(%arg0: i32) -> (i32, i32) {
    %c0_i32 = arith.constant 0 : i32
    %c0_i32_0 = arith.constant 0 : i32
    %c0_i32_1 = arith.constant 0 : i32
    return %c0_i32, %c0_i32_0 : i32, i32
  }
  func.func @transform_2(%arg0: i32) -> (i32, i32) {
    %c0_i32 = arith.constant 0 : i32
    %c0_i32_0 = arith.constant 0 : i32
    %c0_i32_1 = arith.constant 0 : i32
    return %c0_i32, %c0_i32_0 : i32, i32
  }
  func.func @transform_3(%arg0: i32) -> (i32, i32) {
    %c0_i32 = arith.constant 0 : i32
    %c0_i32_0 = arith.constant 0 : i32
    %c0_i32_1 = arith.constant 0 : i32
    return %c0_i32, %c0_i32_0 : i32, i32
  }
  func.func @transform_4(%arg0: i32) -> (i32, i32) {
    %c0_i32 = arith.constant 0 : i32
    %c0_i32_0 = arith.constant 0 : i32
    %c0_i32_1 = arith.constant 0 : i32
    return %c0_i32, %c0_i32_0 : i32, i32
  }
  func.func @transform_5(%arg0: i32) -> (i32, i32) {
    %c0_i32 = arith.constant 0 : i32
    %c0_i32_0 = arith.constant 0 : i32
    return %arg0, %c0_i32 : i32, i32
  }
}

</mosaic_0001>

<llo_original>
// kernel: tpu_custom_call.1
$region0: #{tpu_custom_call.1}
  #allocation0 [shape = 'u32[]', space=smem, size = 0x4, offset = 0x4, fixed_abs, tag = 'smem constant byte address 0x4 - core index']
  #allocation1 [shape = 'u32[72,128]{1,0:T(1,128)}', space=vmem, size = 0x9000, scoped, tag = 'internal scratch']
  %s0 = inlined_call_operand.hbm [shape: f32[8,16], index: 0, kind: input, shape index: {}]
  %s1 = inlined_call_operand.hbm [shape: bf16[16,128], index: 1, kind: input, shape index: {}]
  %s2 = inlined_call_operand.hbm [shape: bf16[128,128], index: 2, kind: input, shape index: {}]
  %s3 = inlined_call_operand.hbm [shape: bf16[128,128], index: 3, kind: input, shape index: {}]
  %s4 = inlined_call_operand.hbm [shape: f32[3,128], index: 4, kind: input, shape index: {}]
  %s5 = inlined_call_operand.vmem [shape: f32[8,2], index: 5, kind: output, shape index: {}]
  %s6 = sld [smem:[#allocation0]]
  $region50: #{tpu_custom_call.1} parent=0
    _
  %s8 = ssub.s32 1, %s6
  %s9 = scalar_select 0, %s8, %s6
  $region1: #{tpu_custom_call.1} parent=0
    #allocation2 [shape = 'u8[4096]{0}', space=vmem, size = 0x1000, scoped, tag = 'input window, operand 0, single buffered']
    #allocation3 [shape = 's32[1]{0}', space=sflag, size = 0x4, scoped, tag = 'scoped memory for tpu_custom_call.1']
    #allocation4 [shape = 'u8[4096]{0}', space=vmem, size = 0x1000, scoped, tag = 'input window, operand 1, single buffered']
    #allocation5 [shape = 's32[1]{0}', space=sflag, size = 0x4, scoped, tag = 'scoped memory for tpu_custom_call.1']
    #allocation6 [shape = 'u8[32768]{0}', space=vmem, size = 0x8000, scoped, tag = 'input window, operand 2, single buffered']
    #allocation7 [shape = 'u8[32768]{0}', space=vmem, size = 0x8000, scoped, tag = 'input window, operand 3, single buffered']
    #allocation8 [shape = 's32[1]{0}', space=sflag, size = 0x4, scoped, tag = 'scoped memory for tpu_custom_call.1']
    #allocation9 [shape = 'u8[2048]{0}', space=vmem, size = 0x800, scoped, tag = 'input window, operand 4, single buffered']
    %10 = vsyncpa [#allocation3], 0
    %11 = vsyncpa [#allocation5], 0
    %12 = vsyncpa [#allocation8], 0
    // Predicated region
    $region2: #{tpu_custom_call.1} parent=1 // pred_check
      _
    $region3: #{tpu_custom_call.1} parent=1 // pred_check_branch
      %14 = sbr.rel (0) target = $region5
    $region4: #{tpu_custom_call.1} parent=1 // pred_region
      %16 = vsyncadd [#allocation3], 0
      %s18 = sshll.u32 %s0, 4
      %s19 = int_to_ptr.hbm [resolvable:$true] %s18
      %s20 = sshll.u32 [#allocation2], 4
      %s21 = int_to_ptr.vmem [resolvable:$true] %s20
      %23 = dma.hbm_to_vmem [thread:$0]  %s19, 128, %s21, [#allocation3]
    $region5: #{tpu_custom_call.1} parent=1 // pred_fallthru
      _
    // Predicated region
    $region6: #{tpu_custom_call.1} parent=1 // pred_check
      _
    $region7: #{tpu_custom_call.1} parent=1 // pred_check_branch
      %25 = sbr.rel (0) target = $region9
    $region8: #{tpu_custom_call.1} parent=1 // pred_region
      %27 = vsyncadd [#allocation5], 0
      %s28 = sshll.u32 %s1, 4
      %s29 = int_to_ptr.hbm [resolvable:$true] %s28
      %s30 = sshll.u32 [#allocation4], 4
      %s31 = int_to_ptr.vmem [resolvable:$true] %s30
      %36 = dma.hbm_to_vmem [thread:$0]  %s29, 128, %s31, [#allocation5], 64, 64, 4
    $region9: #{tpu_custom_call.1} parent=1 // pred_fallthru
      _
    // Predicated region
    $region10: #{tpu_custom_call.1} parent=1 // pred_check
      _
    $region11: #{tpu_custom_call.1} parent=1 // pred_check_branch
      %38 = sbr.rel (0) target = $region13
    $region12: #{tpu_custom_call.1} parent=1 // pred_region
      %40 = vsyncadd [#allocation5], 0
      %s41 = sshll.u32 %s2, 4
      %s42 = int_to_ptr.hbm [resolvable:$true] %s41
      %s43 = sshll.u32 [#allocation6], 4
      %s44 = int_to_ptr.vmem [resolvable:$true] %s43
      %49 = dma.hbm_to_vmem [thread:$0]  %s42, 1024, %s44, [#allocation5], 64, 64, 4
    $region13: #{tpu_custom_call.1} parent=1 // pred_fallthru
      _
    // Predicated region
    $region14: #{tpu_custom_call.1} parent=1 // pred_check
      _
    $region15: #{tpu_custom_call.1} parent=1 // pred_check_branch
      %51 = sbr.rel (0) target = $region17
    $region16: #{tpu_custom_call.1} parent=1 // pred_region
      %53 = vsyncadd [#allocation8], 0
      %s54 = sshll.u32 %s3, 4
      %s55 = int_to_ptr.hbm [resolvable:$true] %s54
      %s56 = sshll.u32 [#allocation7], 4
      %s57 = int_to_ptr.vmem [resolvable:$true] %s56
      %62 = dma.hbm_to_vmem [thread:$0]  %s55, 1024, %s57, [#allocation8], 64, 64, 4
    $region17: #{tpu_custom_call.1} parent=1 // pred_fallthru
      _
    // Predicated region
    $region18: #{tpu_custom_call.1} parent=1 // pred_check
      _
    $region19: #{tpu_custom_call.1} parent=1 // pred_check_branch
      %64 = sbr.rel (0) target = $region21
    $region20: #{tpu_custom_call.1} parent=1 // pred_region
      %66 = vsyncadd [#allocation8], 0
      %s68 = sshll.u32 %s4, 4
      %s69 = int_to_ptr.hbm [resolvable:$true] %s68
      %s70 = sshll.u32 [#allocation9], 4
      %s71 = int_to_ptr.vmem [resolvable:$true] %s70
      %73 = dma.hbm_to_vmem [thread:$0]  %s69, 64, %s71, [#allocation8]
    $region21: #{tpu_custom_call.1} parent=1 // pred_fallthru
      _
    // Predicated region
    $region22: #{tpu_custom_call.1} parent=1 // pred_check
      _
    $region23: #{tpu_custom_call.1} parent=1 // pred_check_branch
      %75 = sbr.rel (0) target = $region25
    $region24: #{tpu_custom_call.1} parent=1 // pred_region
      %77 = dma.done [#allocation3], 128
    $region25: #{tpu_custom_call.1} parent=1 // pred_fallthru
      _
    // Predicated region
    $region26: #{tpu_custom_call.1} parent=1 // pred_check
      _
    $region27: #{tpu_custom_call.1} parent=1 // pred_check_branch
      %79 = sbr.rel (0) target = $region29
    $region28: #{tpu_custom_call.1} parent=1 // pred_region
      %81 = dma.done [#allocation5], 128
    $region29: #{tpu_custom_call.1} parent=1 // pred_fallthru
      _
    // Predicated region
    $region30: #{tpu_custom_call.1} parent=1 // pred_check
      _
    $region31: #{tpu_custom_call.1} parent=1 // pred_check_branch
      %83 = sbr.rel (0) target = $region33
    $region32: #{tpu_custom_call.1} parent=1 // pred_region
      %85 = dma.done [#allocation5], 1024
    $region33: #{tpu_custom_call.1} parent=1 // pred_fallthru
      _
    // Predicated region
    $region34: #{tpu_custom_call.1} parent=1 // pred_check
      _
    $region35: #{tpu_custom_call.1} parent=1 // pred_check_branch
      %87 = sbr.rel (0) target = $region37
    $region36: #{tpu_custom_call.1} parent=1 // pred_region
      %89 = dma.done [#allocation8], 1024
    $region37: #{tpu_custom_call.1} parent=1 // pred_fallthru
      _
    // Predicated region
    $region38: #{tpu_custom_call.1} parent=1 // pred_check
      _
    $region39: #{tpu_custom_call.1} parent=1 // pred_check_branch
      %91 = sbr.rel (0) target = $region41
    $region40: #{tpu_custom_call.1} parent=1 // pred_region
      %93 = dma.done [#allocation8], 64
    $region41: #{tpu_custom_call.1} parent=1 // pred_fallthru
      _
    %v95 = vld [vmem:[#allocation2] sm:$0xff]
    %v96 = vpack.c.bf16 %v95, %v95
    %v97 = vld [vmem:[#allocation4] sm:$0xf]
    %v98 = vld [vmem:[#allocation4 + $0x4] sm:$0xf]
    %v99 = vld [vmem:[#allocation9] sm:$0x1]
    %v100 = vperm.slane %v99, 0
    %v103 = vunpack.c.l.b16 %v97
    %v104 = vunpack.c.l.b16 %v98
    %v105 = vpack.c.b16 %v104, %v103
    %vm107 = vcmask 130048
    %v109 = vsel %vm107, %v96, 0
    %111 = vmatpush.bf16.msra.mxu0 0
    %112 = vmatpush.bf16.msra.mxu0 0
    %113 = vmatpush.bf16.msra.mxu0 0
    %114 = vmatpush.bf16.msra.mxu0 0
    %115 = vmatpush.bf16.msra.mxu0 0
    %116 = vmatpush.bf16.msra.mxu0 0
    %117 = vmatpush.bf16.msra.mxu0 0
    %118 = vmatpush.bf16.msra.mxu0 %v105
    %119 = vmatmul.bf16.gmra.mxu0 %v109
    %v120 = vpop.f32.mrf.mxu0
    %v121 = vadd.f32 %v100, %v120
    %v122 = vpop.f32.mrf.mxu0
    %123 = vdwg.mxu0
    %v124 = vmax.f32 %v121, 0.0
    %v125 = vpack.c.bf16 %v124, %v124
    %v126 = vld [vmem:[#allocation6] sm:$0xf]
    %v127 = vld [vmem:[#allocation6 + $0x4] sm:$0xf]
    %v128 = vld [vmem:[#allocation6 + $0x8] sm:$0xf]
    %v129 = vld [vmem:[#allocation6 + $0xc] sm:$0xf]
    %v130 = vld [vmem:[#allocation6 + $0x10] sm:$0xf]
    %v131 = vld [vmem:[#allocation6 + $0x14] sm:$0xf]
    %v132 = vld [vmem:[#allocation6 + $0x18] sm:$0xf]
    %v133 = vld [vmem:[#allocation6 + $0x1c] sm:$0xf]
    %v134 = vld [vmem:[#allocation6 + $0x20] sm:$0xf]
    %v135 = vld [vmem:[#allocation6 + $0x24] sm:$0xf]
    %v136 = vld [vmem:[#allocation6 + $0x28] sm:$0xf]
    %v137 = vld [vmem:[#allocation6 + $0x2c] sm:$0xf]
    %v138 = vld [vmem:[#allocation6 + $0x30] sm:$0xf]
    %v139 = vld [vmem:[#allocation6 + $0x34] sm:$0xf]
    %v140 = vld [vmem:[#allocation6 + $0x38] sm:$0xf]
    %v141 = vld [vmem:[#allocation6 + $0x3c] sm:$0xf]
    %v142 = vld [vmem:[#allocation9 + $0x1] sm:$0x1]
    %v143 = vperm.slane %v142, 0
    %v160 = vunpack.c.l.b16 %v126
    %v161 = vunpack.c.l.b16 %v127
    %v162 = vunpack.c.l.b16 %v128
    %v163 = vunpack.c.l.b16 %v129
    %v164 = vunpack.c.l.b16 %v130
    %v165 = vunpack.c.l.b16 %v131
    %v166 = vunpack.c.l.b16 %v132
    %v167 = vunpack.c.l.b16 %v133
    %v168 = vunpack.c.l.b16 %v134
    %v169 = vunpack.c.l.b16 %v135
    %v170 = vunpack.c.l.b16 %v136
    %v171 = vunpack.c.l.b16 %v137
    %v172 = vunpack.c.l.b16 %v138
    %v173 = vunpack.c.l.b16 %v139
    %v174 = vunpack.c.l.b16 %v140
    %v175 = vunpack.c.l.b16 %v141
    %v176 = vpack.c.b16 %v161, %v160
    %v177 = vpack.c.b16 %v163, %v162
    %v178 = vpack.c.b16 %v165, %v164
    %v179 = vpack.c.b16 %v167, %v166
    %v180 = vpack.c.b16 %v169, %v168
    %v181 = vpack.c.b16 %v171, %v170
    %v182 = vpack.c.b16 %v173, %v172
    %v183 = vpack.c.b16 %v175, %v174
    %192 = vmatpush.bf16.msra.mxu0 %v183
    %193 = vmatpush.bf16.msra.mxu0 %v182
    %194 = vmatpush.bf16.msra.mxu0 %v181
    %195 = vmatpush.bf16.msra.mxu0 %v180
    %196 = vmatpush.bf16.msra.mxu0 %v179
    %197 = vmatpush.bf16.msra.mxu0 %v178
    %198 = vmatpush.bf16.msra.mxu0 %v177
    %199 = vmatpush.bf16.msra.mxu0 %v176
    %200 = vmatmul.bf16.gmra.mxu0 %v125
    %v201 = vpop.f32.mrf.mxu0
    %v202 = vadd.f32 %v143, %v201
    %v203 = vpop.f32.mrf.mxu0
    %204 = vdwg.mxu0
    %v205 = vmax.f32 %v202, 0.0
    %v206 = vpack.c.bf16 %v205, %v205
    %v207 = vld [vmem:[#allocation7] sm:$0xf]
    %v208 = vld [vmem:[#allocation7 + $0x4] sm:$0xf]
    %v209 = vld [vmem:[#allocation7 + $0x8] sm:$0xf]
    %v210 = vld [vmem:[#allocation7 + $0xc] sm:$0xf]
    %v211 = vld [vmem:[#allocation7 + $0x10] sm:$0xf]
    %v212 = vld [vmem:[#allocation7 + $0x14] sm:$0xf]
    %v213 = vld [vmem:[#allocation7 + $0x18] sm:$0xf]
    %v214 = vld [vmem:[#allocation7 + $0x1c] sm:$0xf]
    %v215 = vld [vmem:[#allocation7 + $0x20] sm:$0xf]
    %v216 = vld [vmem:[#allocation7 + $0x24] sm:$0xf]
    %v217 = vld [vmem:[#allocation7 + $0x28] sm:$0xf]
    %v218 = vld [vmem:[#allocation7 + $0x2c] sm:$0xf]
    %v219 = vld [vmem:[#allocation7 + $0x30] sm:$0xf]
    %v220 = vld [vmem:[#allocation7 + $0x34] sm:$0xf]
    %v221 = vld [vmem:[#allocation7 + $0x38] sm:$0xf]
    %v222 = vld [vmem:[#allocation7 + $0x3c] sm:$0xf]
    %v223 = vld [vmem:[#allocation9 + $0x2] sm:$0x1]
    %v224 = vperm.slane %v223, 0
    %v241 = vunpack.c.l.b16 %v207
    %v242 = vunpack.c.l.b16 %v208
    %v243 = vunpack.c.l.b16 %v209
    %v244 = vunpack.c.l.b16 %v210
    %v245 = vunpack.c.l.b16 %v211
    %v246 = vunpack.c.l.b16 %v212
    %v247 = vunpack.c.l.b16 %v213
    %v248 = vunpack.c.l.b16 %v214
    %v249 = vunpack.c.l.b16 %v215
    %v250 = vunpack.c.l.b16 %v216
    %v251 = vunpack.c.l.b16 %v217
    %v252 = vunpack.c.l.b16 %v218
    %v253 = vunpack.c.l.b16 %v219
    %v254 = vunpack.c.l.b16 %v220
    %v255 = vunpack.c.l.b16 %v221
    %v256 = vunpack.c.l.b16 %v222
    %v257 = vpack.c.b16 %v242, %v241
    %v258 = vpack.c.b16 %v244, %v243
    %v259 = vpack.c.b16 %v246, %v245
    %v260 = vpack.c.b16 %v248, %v247
    %v261 = vpack.c.b16 %v250, %v249
    %v262 = vpack.c.b16 %v252, %v251
    %v263 = vpack.c.b16 %v254, %v253
    %v264 = vpack.c.b16 %v256, %v255
    %273 = vmatpush.bf16.msra.mxu0 %v264
    %274 = vmatpush.bf16.msra.mxu0 %v263
    %275 = vmatpush.bf16.msra.mxu0 %v262
    %276 = vmatpush.bf16.msra.mxu0 %v261
    %277 = vmatpush.bf16.msra.mxu0 %v260
    %278 = vmatpush.bf16.msra.mxu0 %v259
    %279 = vmatpush.bf16.msra.mxu0 %v258
    %280 = vmatpush.bf16.msra.mxu0 %v257
    %281 = vmatmul.bf16.gmra.mxu0 %v206
    %v282 = vpop.f32.mrf.mxu0
    %v283 = vadd.f32 %v224, %v282
    %v284 = vpop.f32.mrf.mxu0
    %285 = vdwg.mxu0
    %vm286 = vcmask 15360
    %287 = vst.msk [vmem:[%s5] sm:$0xff] %vm286, %v283
    // Predicated region
    $region42: #{tpu_custom_call.1} parent=1 // pred_check
      _
    $region43: #{tpu_custom_call.1} parent=1 // pred_check_branch
      %289 = sbr.rel (0) target = $region45
    $region44: #{tpu_custom_call.1} parent=1 // pred_region
      _
    $region45: #{tpu_custom_call.1} parent=1 // pred_fallthru
      _
    // Predicated region
    $region46: #{tpu_custom_call.1} parent=1 // pred_check
      _
    $region47: #{tpu_custom_call.1} parent=1 // pred_check_branch
      %291 = sbr.rel (0) target = $region49
    $region48: #{tpu_custom_call.1} parent=1 // pred_region
      _
    $region49: #{tpu_custom_call.1} parent=1 // pred_fallthru
      _
    %292 = vsyncpa [#allocation3], 1
    %293 = vsyncpa [#allocation5], 1
    %294 = vsyncpa [#allocation8], 1

</llo_original>
